<compile_context>
chip_gen: v6e
topology: v6e:2x2x1
jax: 0.10.0
libtpu: 0.0.40
codegen_flags: <defaults>
</compile_context>

<pallas_src>
import functools

import jax
import jax.numpy as jnp
from jax.experimental import pallas as pl
from jax.experimental.pallas import tpu as pltpu


def _cls_pos_kernel(pred_ref, l0_ref, l1_ref, l2_ref, out_ref, acc_ref, pos_ref,
                    *, tb, batch_axis, batch_size, need_row_mask):
    t = pl.program_id(1)  # inner (reduction) axis

    @pl.when(t == 0)
    def _():
        acc_ref[...] = jnp.zeros_like(acc_ref)
        pos_ref[...] = jnp.zeros_like(pos_ref)

    p = pred_ref[...].astype(jnp.float32)    # (tb, thw)
    l0 = l0_ref[...].astype(jnp.float32)
    l1 = l1_ref[...].astype(jnp.float32)
    l2 = l2_ref[...].astype(jnp.float32)

    # nn.BCELoss(reduction='none'): -(y*log(x) + (1-y)*log(1-x)), logs clamped at -100
    logp = jnp.maximum(jnp.log(p), -100.0)
    log1mp = jnp.maximum(jnp.log(1.0 - p), -100.0)
    log_loss = -(l2 * logp + (1.0 - l2) * log1mp)

    one_m_p = 1.0 - p
    fore = l2 * (one_m_p * one_m_p)
    one_m_l0 = 1.0 - l0
    one_m_l0_sq = one_m_l0 * one_m_l0
    back = (l1 - l2) * (one_m_l0_sq * one_m_l0_sq) * (p * p)
    w = (fore + back) * log_loss

    if need_row_mask:
        # Ragged last batch block: mask rows >= B.  jnp.where is a select, so
        # garbage read past the array edge cannot propagate NaN/Inf.
        b_blk = pl.program_id(batch_axis)
        rows = b_blk * tb + jax.lax.broadcasted_iota(jnp.int32, (tb, 1), 0)
        ok = rows < batch_size
        w = jnp.where(ok, w, 0.0)
        l2 = jnp.where(ok, l2, 0.0)

    # Hot loop: full-width VALU accumulate + a cheap per-row lane reduce.
    acc_ref[...] += w
    pos_ref[...] += jnp.sum(l2, axis=1, keepdims=True)

    @pl.when(t == pl.num_programs(1) - 1)
    def _():
        out_ref[0, 0] = jnp.sum(acc_ref[...])   # weighted-loss partial
        out_ref[0, 1] = jnp.sum(pos_ref[...])   # positives partial


def cls_pos_loss(pos_pred, pos_label, *, tile_elems=256 * 1024, max_rows=256):
    """pos_pred: (B,1,H,W) probabilities; pos_label: (B,3,H,W).  f32 or bf16."""
    B, cp, H, W = pos_pred.shape
    assert cp == 1 and pos_label.shape == (B, 3, H, W)
    hw = H * W

    if hw % 128 == 0:
        hwp = hw
        pred = pos_pred.reshape(B, hw)           # free reshape of contiguous NCHW
        lab = pos_label.reshape(B, 3 * hw)
    else:
        # TODO(synk): replace this materialized spatial pad with in-kernel lane
        # masking; it only triggers when H*W is not a multiple of 128.
        hwp = ((hw + 127) // 128) * 128
        pred = jnp.pad(pos_pred.reshape(B, 1, hw), ((0, 0), (0, 0), (0, hwp - hw)),
                       constant_values=0.5).reshape(B, hwp)
        lab = jnp.pad(pos_label.reshape(B, 3, hw), ((0, 0), (0, 0), (0, hwp - hw)),
                      constant_values=0.0).reshape(B, 3 * hwp)

    # ---- tile sizing: ~tile_elems per stream per step, no batch padding ----
    if B <= max_rows:
        tb = B                                   # full batch dim is always a legal block height
    else:
        tb = (max_rows // 8) * 8
    need_row_mask = (B % tb) != 0

    hw128 = hwp // 128
    lane_target = max(1, tile_elems // max(tb, 1) // 128)
    d = 1
    for cand in range(min(hw128, lane_target), 0, -1):
        if hw128 % cand == 0:                    # thw must divide hwp so channel
            d = cand                             # offsets stay block-aligned
            break
    thw = 128 * d
    sb = hwp // thw                              # spatial blocks per channel

    n_b = -(-B // tb)
    n_s = sb

    # Outer axis = the one with the most blocks (best "parallel" sharding on
    # v7x); inner axis is the reduction axis for the accumulators.
    batch_outer = n_b >= n_s
    if batch_outer:
        grid = (n_b, n_s)
        batch_axis = 0
        bs = lambda o, i: o
        ss = lambda o, i: i
    else:
        grid = (n_s, n_b)
        batch_axis = 1
        bs = lambda o, i: i
        ss = lambda o, i: o

    kernel = functools.partial(
        _cls_pos_kernel, tb=tb, batch_axis=batch_axis,
        batch_size=B, need_row_mask=need_row_mask)

    n_elem = B * hw
    cost = pl.CostEstimate(
        flops=22 * n_elem,
        transcendentals=2 * n_elem,
        bytes_accessed=int(pred.size) * pred.dtype.itemsize
        + int(lab.size) * lab.dtype.itemsize + grid[0] * 2 * 4,
    )

    partials = pl.pallas_call(
        kernel,
        out_shape=jax.ShapeDtypeStruct((grid[0], 2), jnp.float32),
        grid_spec=pltpu.PrefetchScalarGridSpec(
            num_scalar_prefetch=0,
            grid=grid,
            in_specs=[
                # pred channel 0
                pl.BlockSpec((tb, thw), lambda o, i: (bs(o, i), ss(o, i))),
                # labels: same HBM array three times, lane-aligned channel offsets
                pl.BlockSpec((tb, thw), lambda o, i: (bs(o, i), 0 * sb + ss(o, i))),
                pl.BlockSpec((tb, thw), lambda o, i: (bs(o, i), 1 * sb + ss(o, i))),
                pl.BlockSpec((tb, thw), lambda o, i: (bs(o, i), 2 * sb + ss(o, i))),
            ],
            out_specs=pl.BlockSpec((1, 2), lambda o, i: (o, 0),
                                   memory_space=pltpu.SMEM),
            scratch_shapes=[pltpu.VMEM((tb, thw), jnp.float32),   # weighted-loss acc
                            pltpu.VMEM((tb, 1), jnp.float32)],    # positives row acc
        ),
        compiler_params=pltpu.CompilerParams(
            dimension_semantics=("parallel", "arbitrary"),
            vmem_limit_bytes=32 * 1024 * 1024,
        ),
        cost_estimate=cost,
    )(pred, lab, lab, lab)

    loss_sum = jnp.sum(partials[:, 0])
    pos_sum = jnp.sum(partials[:, 1])
    return 0.01 * loss_sum / jnp.maximum(1.0, pos_sum)


def _reference(pos_pred, pos_label):
    p = pos_pred[:, 0, :, :].astype(jnp.float32)
    l0 = pos_label[:, 0, :, :].astype(jnp.float32)
    l1 = pos_label[:, 1, :, :].astype(jnp.float32)
    l2 = pos_label[:, 2, :, :].astype(jnp.float32)
    logp = jnp.maximum(jnp.log(p), -100.0)
    log1mp = jnp.maximum(jnp.log(1.0 - p), -100.0)
    log_loss = -(l2 * logp + (1.0 - l2) * log1mp)
    fore = l2 * (1.0 - p) ** 2
    back = (l1 - l2) * (1.0 - l0) ** 4 * p ** 2
    focal = fore + back
    assigned = jnp.sum(l2)
    return 0.01 * jnp.sum(focal * log_loss) / jnp.maximum(1.0, assigned)


if __name__ == "__main__":
    key = jax.random.PRNGKey(0)
    k1, k2 = jax.random.split(key)
    B, H, W = 2, 16, 16

    # pos_pred must be probabilities in (0,1) (BCELoss input)
    pos_pred = jax.nn.sigmoid(jax.random.normal(k1, (B, 1, H, W), jnp.float32))
    # labels in [0,1]; channel 2 sparse-ish positives, channel 1 >= channel 2
    raw = jax.random.uniform(k2, (B, 3, H, W), jnp.float32)
    lab2 = (raw[:, 2] > 0.9).astype(jnp.float32)
    lab1 = jnp.maximum(lab2, (raw[:, 1] > 0.5).astype(jnp.float32))
    lab0 = raw[:, 0]
    pos_label = jnp.stack([lab0, lab1, lab2], axis=1)

    loss = cls_pos_loss(pos_pred, pos_label)
    jax.block_until_ready(loss)

    ref = _reference(pos_pred, pos_label)
    assert jnp.allclose(loss, ref, rtol=1e-5, atol=1e-6), (loss, ref)
    print("KERNEL_OK")
</pallas_src>

<mosaic_0001>
module attributes {stable_mosaic.version = 11 : i64} {
  func.func @_cls_pos_kernel(%arg0: i32, %arg1: i32, %arg2: memref<2x256xf32, #tpu.memory_space<vmem>>, %arg3: memref<2x256xf32, #tpu.memory_space<vmem>>, %arg4: memref<2x256xf32, #tpu.memory_space<vmem>>, %arg5: memref<2x256xf32, #tpu.memory_space<vmem>>, %arg6: memref<1x2xf32, #tpu.memory_space<smem>>, %arg7: memref<2x256xf32, #tpu.memory_space<vmem>>, %arg8: memref<2x1xf32, #tpu.memory_space<vmem>>) attributes {dimension_semantics = [#tpu.dimension_semantics<parallel>, #tpu.dimension_semantics<arbitrary>], iteration_bounds = array<i64: 1, 1>, scalar_prefetch = 0 : i64, scratch_operands = 2 : i64, tpu.core_type = #tpu.core_type<tc>, window_params = [{transform_indices = @transform_0, window_bounds = array<i64: 2, 256>}, {transform_indices = @transform_1, window_bounds = array<i64: 2, 256>}, {transform_indices = @transform_2, window_bounds = array<i64: 2, 256>}, {transform_indices = @transform_3, window_bounds = array<i64: 2, 256>}, {transform_indices = @transform_4, window_bounds = array<i64: 1, 2>}]} {
    %c0_i32 = arith.constant 0 : i32
    %0 = arith.cmpi eq, %arg1, %c0_i32 : i32
    %1 = arith.extui %0 : i1 to i32
    %c0_i32_0 = arith.constant 0 : i32
    %2 = arith.cmpi ne, %1, %c0_i32_0 : i32
    scf.if %2 {
      %cst_25 = arith.constant 0.000000e+00 : f32
      %47 = vector.broadcast %cst_25 : f32 to vector<2x256xf32>
      %c0_26 = arith.constant 0 : index
      %c0_27 = arith.constant 0 : index
      %48 = vector.load %arg7[%c0_26, %c0_27] : memref<2x256xf32, #tpu.memory_space<vmem>>, vector<2x256xf32>
      tpu.vector_store %arg7[%c0_26, %c0_27], %47 {strides = array<i32>} : memref<2x256xf32, #tpu.memory_space<vmem>>, vector<2x256xf32>,
      %cst_28 = arith.constant 0.000000e+00 : f32
      %49 = vector.broadcast %cst_28 : f32 to vector<2x1xf32>
      %c0_29 = arith.constant 0 : index
      %c0_30 = arith.constant 0 : index
      %50 = vector.load %arg8[%c0_29, %c0_30] : memref<2x1xf32, #tpu.memory_space<vmem>>, vector<2x1xf32>
      tpu.vector_store %arg8[%c0_29, %c0_30], %49 {strides = array<i32>} : memref<2x1xf32, #tpu.memory_space<vmem>>, vector<2x1xf32>,
    } else {
    }
    %c0 = arith.constant 0 : index
    %c0_1 = arith.constant 0 : index
    %3 = vector.load %arg2[%c0, %c0_1] : memref<2x256xf32, #tpu.memory_space<vmem>>, vector<2x256xf32>
    %c0_2 = arith.constant 0 : index
    %c0_3 = arith.constant 0 : index
    %4 = vector.load %arg3[%c0_2, %c0_3] : memref<2x256xf32, #tpu.memory_space<vmem>>, vector<2x256xf32>
    %c0_4 = arith.constant 0 : index
    %c0_5 = arith.constant 0 : index
    %5 = vector.load %arg4[%c0_4, %c0_5] : memref<2x256xf32, #tpu.memory_space<vmem>>, vector<2x256xf32>
    %c0_6 = arith.constant 0 : index
    %c0_7 = arith.constant 0 : index
    %6 = vector.load %arg5[%c0_6, %c0_7] : memref<2x256xf32, #tpu.memory_space<vmem>>, vector<2x256xf32>
    %7 = math.log %3 : vector<2x256xf32>
    %cst = arith.constant -1.000000e+02 : f32
    %8 = vector.broadcast %cst : f32 to vector<2x256xf32>
    %9 = arith.maximumf %7, %8 : vector<2x256xf32>
    %cst_8 = arith.constant 1.000000e+00 : f32
    %10 = vector.broadcast %cst_8 : f32 to vector<2x256xf32>
    %11 = arith.subf %10, %3 : vector<2x256xf32>
    %12 = math.log %11 : vector<2x256xf32>
    %cst_9 = arith.constant -1.000000e+02 : f32
    %13 = vector.broadcast %cst_9 : f32 to vector<2x256xf32>
    %14 = arith.maximumf %12, %13 : vector<2x256xf32>
    %15 = arith.mulf %6, %9 : vector<2x256xf32>
    %cst_10 = arith.constant 1.000000e+00 : f32
    %16 = vector.broadcast %cst_10 : f32 to vector<2x256xf32>
    %17 = arith.subf %16, %6 : vector<2x256xf32>
    %18 = arith.mulf %17, %14 : vector<2x256xf32>
    %19 = arith.addf %15, %18 : vector<2x256xf32>
    %cst_11 = arith.constant 0.000000e+00 : f32
    %20 = vector.broadcast %cst_11 : f32 to vector<2x256xf32>
    %21 = arith.subf %20, %19 : vector<2x256xf32>
    %cst_12 = arith.constant 1.000000e+00 : f32
    %22 = vector.broadcast %cst_12 : f32 to vector<2x256xf32>
    %23 = arith.subf %22, %3 : vector<2x256xf32>
    %24 = arith.mulf %23, %23 : vector<2x256xf32>
    %25 = arith.mulf %6, %24 : vector<2x256xf32>
    %cst_13 = arith.constant 1.000000e+00 : f32
    %26 = vector.broadcast %cst_13 : f32 to vector<2x256xf32>
    %27 = arith.subf %26, %4 : vector<2x256xf32>
    %28 = arith.mulf %27, %27 : vector<2x256xf32>
    %29 = arith.subf %5, %6 : vector<2x256xf32>
    %30 = arith.mulf %28, %28 : vector<2x256xf32>
    %31 = arith.mulf %29, %30 : vector<2x256xf32>
    %32 = arith.mulf %3, %3 : vector<2x256xf32>
    %33 = arith.mulf %31, %32 : vector<2x256xf32>
    %34 = arith.addf %25, %33 : vector<2x256xf32>
    %35 = arith.mulf %34, %21 : vector<2x256xf32>
    %c0_14 = arith.constant 0 : index
    %c0_15 = arith.constant 0 : index
    %36 = vector.load %arg7[%c0_14, %c0_15] : memref<2x256xf32, #tpu.memory_space<vmem>>, vector<2x256xf32>
    %37 = arith.addf %36, %35 : vector<2x256xf32>
    %c0_16 = arith.constant 0 : index
    %c0_17 = arith.constant 0 : index
    %38 = vector.load %arg7[%c0_16, %c0_17] : memref<2x256xf32, #tpu.memory_space<vmem>>, vector<2x256xf32>
    tpu.vector_store %arg7[%c0_16, %c0_17], %37 {strides = array<i32>} : memref<2x256xf32, #tpu.memory_space<vmem>>, vector<2x256xf32>,
    %c0_18 = arith.constant 0 : index
    %c0_19 = arith.constant 0 : index
    %39 = vector.load %arg8[%c0_18, %c0_19] : memref<2x1xf32, #tpu.memory_space<vmem>>, vector<2x1xf32>
    %cst_20 = arith.constant dense<0.000000e+00> : vector<2xf32>
    %40 = vector.multi_reduction <add>, %6, %cst_20 [1] : vector<2x256xf32> to vector<2xf32>
    %41 = vector.shape_cast %40 : vector<2xf32> to vector<2x1xf32>
    %42 = arith.addf %39, %41 : vector<2x1xf32>
    %c0_21 = arith.constant 0 : index
    %c0_22 = arith.constant 0 : index
    %43 = vector.load %arg8[%c0_21, %c0_22] : memref<2x1xf32, #tpu.memory_space<vmem>>, vector<2x1xf32>
    tpu.vector_store %arg8[%c0_21, %c0_22], %42 {strides = array<i32>} : memref<2x1xf32, #tpu.memory_space<vmem>>, vector<2x1xf32>,
    %c0_i32_23 = arith.constant 0 : i32
    %44 = arith.cmpi eq, %arg1, %c0_i32_23 : i32
    %45 = arith.extui %44 : i1 to i32
    %c0_i32_24 = arith.constant 0 : i32
    %46 = arith.cmpi ne, %45, %c0_i32_24 : i32
    scf.if %46 {
      %c0_25 = arith.constant 0 : index
      %c0_26 = arith.constant 0 : index
      %47 = vector.load %arg7[%c0_25, %c0_26] : memref<2x256xf32, #tpu.memory_space<vmem>>, vector<2x256xf32>
      %48 = vector.shape_cast %47 : vector<2x256xf32> to vector<1x2x256xf32>
      %cst_27 = arith.constant dense<0.000000e+00> : vector<1xf32>
      %49 = vector.multi_reduction <add>, %48, %cst_27 [1, 2] : vector<1x2x256xf32> to vector<1xf32>
      %50 = vector.shape_cast %49 : vector<1xf32> to vector<1x1x1xf32>
      %51 = vector.extract %50[0, 0, 0] : f32 from vector<1x1x1xf32>
      %c0_28 = arith.constant 0 : index
      %c0_29 = arith.constant 0 : index
      %52 = memref.load %arg6[%c0_28, %c0_29] : memref<1x2xf32, #tpu.memory_space<smem>>
      memref.store %51, %arg6[%c0_28, %c0_29] : memref<1x2xf32, #tpu.memory_space<smem>>
      %c0_30 = arith.constant 0 : index
      %c0_31 = arith.constant 0 : index
      %53 = vector.load %arg8[%c0_30, %c0_31] : memref<2x1xf32, #tpu.memory_space<vmem>>, vector<2x1xf32>
      %54 = vector.shape_cast %53 : vector<2x1xf32> to vector<1x2x1xf32>
      %cst_32 = arith.constant dense<0.000000e+00> : vector<1xf32>
      %55 = vector.multi_reduction <add>, %54, %cst_32 [1, 2] : vector<1x2x1xf32> to vector<1xf32>
      %56 = vector.shape_cast %55 : vector<1xf32> to vector<1x1x1xf32>
      %57 = vector.extract %56[0, 0, 0] : f32 from vector<1x1x1xf32>
      %c0_33 = arith.constant 0 : index
      %c1 = arith.constant 1 : index
      %58 = memref.load %arg6[%c0_33, %c1] : memref<1x2xf32, #tpu.memory_space<smem>>
      memref.store %57, %arg6[%c0_33, %c1] : memref<1x2xf32, #tpu.memory_space<smem>>
    } else {
    }
    return
  }
  func.func @transform_0(%arg0: i32, %arg1: i32) -> (i32, i32) {
    %c0_i32 = arith.constant 0 : i32
    return %arg0, %arg1 : i32, i32
  }
  func.func @transform_1(%arg0: i32, %arg1: i32) -> (i32, i32) {
    %c0_i32 = arith.constant 0 : i32
    %0 = arith.addi %c0_i32, %arg1 : i32
    %c0_i32_0 = arith.constant 0 : i32
    return %arg0, %0 : i32, i32
  }
  func.func @transform_2(%arg0: i32, %arg1: i32) -> (i32, i32) {
    %c1_i32 = arith.constant 1 : i32
    %0 = arith.addi %c1_i32, %arg1 : i32
    %c0_i32 = arith.constant 0 : i32
    return %arg0, %0 : i32, i32
  }
  func.func @transform_3(%arg0: i32, %arg1: i32) -> (i32, i32) {
    %c2_i32 = arith.constant 2 : i32
    %0 = arith.addi %c2_i32, %arg1 : i32
    %c0_i32 = arith.constant 0 : i32
    return %arg0, %0 : i32, i32
  }
  func.func @transform_4(%arg0: i32, %arg1: i32) -> (i32, i32) {
    %c0_i32 = arith.constant 0 : i32
    %c0_i32_0 = arith.constant 0 : i32
    return %arg0, %c0_i32 : i32, i32
  }
}

</mosaic_0001>

<llo_original>
// kernel: tpu_custom_call.1
$region0: #{tpu_custom_call.1}
  #allocation0 [shape = 'u32[]', space=smem, size = 0x4, offset = 0x4, fixed_abs, tag = 'smem constant byte address 0x4 - core index']
  #allocation1 [shape = 'u32[144,128]{1,0:T(1,128)}', space=vmem, size = 0x12000, scoped, tag = 'internal scratch']
  #allocation2 [shape = 'f32[2,256]{1,0:T(2,128)}', space=vmem, size = 0x800, scoped, tag = 'scratch operand']
  #allocation3 [shape = 'f32[2,1]{1,0:T(2,128)}', space=vmem, size = 0x400, scoped, tag = 'scratch operand']
  %s0 = inlined_call_operand.hbm [shape: f32[2,256], index: 0, kind: input, shape index: {}]
  %s1 = inlined_call_operand.hbm [shape: f32[2,768], index: 1, kind: input, shape index: {}]
  %s2 = inlined_call_operand.hbm [shape: f32[2,768], index: 2, kind: input, shape index: {}]
  %s3 = inlined_call_operand.hbm [shape: f32[2,768], index: 3, kind: input, shape index: {}]
  %s4 = inlined_call_operand.hbm [shape: f32[1,2], index: 4, kind: output, shape index: {}]
  %s5 = sld [smem:[#allocation0]]
  $region50: #{tpu_custom_call.1} parent=0
    _
  %s7 = ssub.s32 1, %s5
  %s8 = scalar_select 0, %s7, %s5
  $region1: #{tpu_custom_call.1} parent=0
    #allocation4 [shape = 'u8[2048]{0}', space=vmem, size = 0x800, scoped, tag = 'input window, operand 0, single buffered']
    #allocation5 [shape = 's32[1]{0}', space=sflag, size = 0x4, scoped, tag = 'scoped memory for tpu_custom_call.1']
    #allocation6 [shape = 's32[1]{0}', space=sflag, size = 0x4, scoped, tag = 'scoped memory for tpu_custom_call.1']
    #allocation7 [shape = 'u8[2048]{0}', space=vmem, size = 0x800, scoped, tag = 'input window, operand 1, single buffered']
    #allocation8 [shape = 's32[1]{0}', space=sflag, size = 0x4, scoped, tag = 'scoped memory for tpu_custom_call.1']
    #allocation9 [shape = 'u8[2048]{0}', space=vmem, size = 0x800, scoped, tag = 'input window, operand 2, single buffered']
    #allocation10 [shape = 'u8[2048]{0}', space=vmem, size = 0x800, scoped, tag = 'input window, operand 3, single buffered']
    #allocation11 [shape = 's32[1]{0}', space=sflag, size = 0x4, scoped, tag = 'scoped memory for tpu_custom_call.1']
    #allocation12 [shape = 'u8[512]{0}', space=smem, size = 0x200, scoped, tag = 'output window, operand 0, single buffered']
    %9 = vsyncpa [#allocation5], 0
    %10 = vsyncpa [#allocation8], 0
    %11 = vsyncpa [#allocation11], 0
    %12 = vsyncpa [#allocation6], 0
    // Predicated region
    $region2: #{tpu_custom_call.1} parent=1 // pred_check
      _
    $region3: #{tpu_custom_call.1} parent=1 // pred_check_branch
      %14 = sbr.rel (0) target = $region5
    $region4: #{tpu_custom_call.1} parent=1 // pred_region
      %s16 = ssub.s32 64, 64
      %17 = vsyncadd [#allocation5], %s16
      %s19 = sshll.u32 [#allocation4], 4
      %s20 = int_to_ptr.vmem [resolvable:$true] %s19
      %22 = dma.hbm_to_vmem [thread:$0]  %s0, 64, %s20, [#allocation5]
    $region5: #{tpu_custom_call.1} parent=1 // pred_fallthru
      _
    // Predicated region
    $region6: #{tpu_custom_call.1} parent=1 // pred_check
      _
    $region7: #{tpu_custom_call.1} parent=1 // pred_check_branch
      %24 = sbr.rel (0) target = $region9
    $region8: #{tpu_custom_call.1} parent=1 // pred_region
      %s26 = ssub.s32 64, 64
      %27 = vsyncadd [#allocation8], %s26
      %s29 = sshll.u32 [#allocation7], 4
      %s30 = int_to_ptr.vmem [resolvable:$true] %s29
      %32 = dma.hbm_to_vmem [thread:$0]  %s1, 64, %s30, [#allocation8]
    $region9: #{tpu_custom_call.1} parent=1 // pred_fallthru
      _
    // Predicated region
    $region10: #{tpu_custom_call.1} parent=1 // pred_check
      _
    $region11: #{tpu_custom_call.1} parent=1 // pred_check_branch
      %34 = sbr.rel (0) target = $region13
    $region12: #{tpu_custom_call.1} parent=1 // pred_region
      %s35 = sadd.s32 0, 1
      %s36 = smul.u32 2, %s35
      %s38 = ssub.s32 64, 64
      %39 = vsyncadd [#allocation8], %s38
      %s40 = smul.addr %s36, 32
      %s41 = scalar_lea.hbm %s2, %s40
      %s43 = sshll.u32 [#allocation9], 4
      %s44 = int_to_ptr.vmem [resolvable:$true] %s43
      %46 = dma.hbm_to_vmem [thread:$0]  %s41, 64, %s44, [#allocation8]
    $region13: #{tpu_custom_call.1} parent=1 // pred_fallthru
      _
    // Predicated region
    $region14: #{tpu_custom_call.1} parent=1 // pred_check
      _
    $region15: #{tpu_custom_call.1} parent=1 // pred_check_branch
      %48 = sbr.rel (0) target = $region17
    $region16: #{tpu_custom_call.1} parent=1 // pred_region
      %s49 = sadd.s32 0, 2
      %s50 = smul.u32 2, %s49
      %s52 = ssub.s32 64, 64
      %53 = vsyncadd [#allocation11], %s52
      %s54 = smul.addr %s50, 32
      %s55 = scalar_lea.hbm %s3, %s54
      %s57 = sshll.u32 [#allocation10], 4
      %s58 = int_to_ptr.vmem [resolvable:$true] %s57
      %60 = dma.hbm_to_vmem [thread:$0]  %s55, 64, %s58, [#allocation11]
    $region17: #{tpu_custom_call.1} parent=1 // pred_fallthru
      _
    // Predicated region
    $region18: #{tpu_custom_call.1} parent=1 // pred_check
      _
    $region19: #{tpu_custom_call.1} parent=1 // pred_check_branch
      %62 = sbr.rel (0) target = $region21
    $region20: #{tpu_custom_call.1} parent=1 // pred_region
      %63 = dma.done [#allocation5], 64
    $region21: #{tpu_custom_call.1} parent=1 // pred_fallthru
      _
    // Predicated region
    $region22: #{tpu_custom_call.1} parent=1 // pred_check
      _
    $region23: #{tpu_custom_call.1} parent=1 // pred_check_branch
      %65 = sbr.rel (0) target = $region25
    $region24: #{tpu_custom_call.1} parent=1 // pred_region
      %66 = dma.done [#allocation8], 64
    $region25: #{tpu_custom_call.1} parent=1 // pred_fallthru
      _
    // Predicated region
    $region26: #{tpu_custom_call.1} parent=1 // pred_check
      _
    $region27: #{tpu_custom_call.1} parent=1 // pred_check_branch
      %68 = sbr.rel (0) target = $region29
    $region28: #{tpu_custom_call.1} parent=1 // pred_region
      %69 = dma.done [#allocation8], 64
    $region29: #{tpu_custom_call.1} parent=1 // pred_fallthru
      _
    // Predicated region
    $region30: #{tpu_custom_call.1} parent=1 // pred_check
      _
    $region31: #{tpu_custom_call.1} parent=1 // pred_check_branch
      %71 = sbr.rel (0) target = $region33
    $region32: #{tpu_custom_call.1} parent=1 // pred_region
      %72 = dma.done [#allocation11], 64
    $region33: #{tpu_custom_call.1} parent=1 // pred_fallthru
      _
    %s73 = sadd.s32 0, 1
    %s74 = smul.u32 2, %s73
    %s75 = sadd.s32 0, 2
    %s76 = smul.u32 2, %s75
    %p77 = scmp.eq.s32.totalorder 0, 0
    // Predicated region
    $region34: #{tpu_custom_call.1} parent=1 // pred_check
      %p78 = pneg %p77
    $region35: #{tpu_custom_call.1} parent=1 // pred_check_branch
      %80 = sbr.rel (%p78) target = $region37
    $region36: #{tpu_custom_call.1} parent=1 // pred_region
      %81 = vst [vmem:[#allocation2] sm:$0xf] 0.0
      %vm82 = vcmask 1024
      %83 = vst.msk [vmem:[#allocation3] sm:$0x3] %vm82, 0.0
    $region37: #{tpu_custom_call.1} parent=1 // pred_fallthru
      _
    %v84 = vld [vmem:[#allocation4] sm:$0xf]
    %v85 = vld [vmem:[#allocation7] sm:$0xf]
    %v86 = vld [vmem:[#allocation9] sm:$0xf]
    %v87 = vld [vmem:[#allocation10] sm:$0xf]
    %v88 = vlog2.pop %v84
    %v89 = vmul.f32 %v88, 0.6931472
    %v90 = vmax.f32 %v89, -100.0
    %v91 = vsub.f32 1.0, %v84
    %v92 = vlog2.pop %v91
    %v93 = vmul.f32 %v92, 0.6931472
    %v94 = vmax.f32 %v93, -100.0
    %v95 = vmul.f32 %v87, %v90
    %v96 = vsub.f32 1.0, %v87
    %v97 = vmul.f32 %v96, %v94
    %v98 = vadd.f32 %v95, %v97
    %v99 = vsub.f32 0.0, %v98
    %v100 = vmul.f32 %v91, %v91
    %v101 = vmul.f32 %v87, %v100
    %v102 = vsub.f32 1.0, %v85
    %v103 = vmul.f32 %v102, %v102
    %v104 = vsub.f32 %v86, %v87
    %v105 = vmul.f32 %v103, %v103
    %v106 = vmul.f32 %v104, %v105
    %v107 = vmul.f32 %v84, %v84
    %v108 = vmul.f32 %v106, %v107
    %v109 = vadd.f32 %v101, %v108
    %v110 = vmul.f32 %v109, %v99
    %v111 = vld [vmem:[#allocation2] sm:$0xf]
    %v112 = vadd.f32 %v111, %v110
    %113 = vst [vmem:[#allocation2] sm:$0xf] %v112
    %v114 = vld [vmem:[#allocation3] sm:$0x3]
    %v117 = vunpack.c.l.s4 1983009808
    %v118 = vunpack.c.0.s8 %v117
    %v119 = vlaneseq
    %v120 = vshrl.u32 %v119, 7
    %v121 = vsub.s32 %v118, %v120
    %v122 = vrot.slane %v87, %v121
    %v123 = vcombine.high %v122, %v122
    %vm126 = vcmask 1041408
    %v127 = vsel %vm126, %v122, 0.0
    %v128 = vsel %vm126, %v123, 0.0
    %v129 = vadd.f32 %v127, %v128
    %130 = vadd.xlane.f32.xlu0 %v129
    %v131 = vpop.xlane.xlu0 %130
    %v132 = vadd.f32 %v114, %v131
    %vm133 = vcmask 1024
    %134 = vst.msk [vmem:[#allocation3] sm:$0x3] %vm133, %v132
    // Predicated region
    $region38: #{tpu_custom_call.1} parent=1 // pred_check
      %p135 = pneg %p77
    $region39: #{tpu_custom_call.1} parent=1 // pred_check_branch
      %137 = sbr.rel (%p135) target = $region41
    $region40: #{tpu_custom_call.1} parent=1 // pred_region
      %v138 = vld [vmem:[#allocation2] sm:$0xf]
      %v141 = vunpack.c.l.s4 1983009808
      %v142 = vunpack.c.0.s8 %v141
      %v143 = vlaneseq
      %v144 = vshrl.u32 %v143, 7
      %v145 = vsub.s32 %v142, %v144
      %v146 = vrot.slane %v138, %v145
      %v147 = vcombine.high %v146, %v146
      %v150 = vsel %vm126, %v146, 0.0
      %v151 = vsel %vm126, %v147, 0.0
      %v152 = vadd.f32 %v150, %v151
      %153 = vadd.xlane.f32.xlu0 %v152
      %v154 = vpop.xlane.xlu0 %153
      %v155 = vrot.slane %v154, 4
      %v156 = vadd.f32 %v154, %v155
      %v157 = vrot.slane %v156, 2
      %v158 = vadd.f32 %v156, %v157
      %v159 = vrot.slane %v158, 1
      %v160 = vadd.f32 %v158, %v159
      %s161 = vtos %v160
      %s162 = scalar_lea.smem [#allocation12], 0
      %163 = sst [smem:[%s162]] %s161
      %v164 = vld [vmem:[#allocation3] sm:$0x3]
      %v165 = vsel %vm133, %v164, 0.0
      %166 = vadd.xlane.f32.xlu0 %v165
      %v167 = vpop.xlane.xlu0 %166
      %v168 = vrot.slane %v167, 4
      %v169 = vadd.f32 %v167, %v168
      %v170 = vrot.slane %v169, 2
      %v171 = vadd.f32 %v169, %v170
      %v172 = vrot.slane %v171, 1
      %v173 = vadd.f32 %v171, %v172
      %s174 = vtos %v173
      %s175 = scalar_lea.smem [#allocation12], 1
      %176 = sst [smem:[%s175]] %s174
    $region41: #{tpu_custom_call.1} parent=1 // pred_fallthru
      _
    // Predicated region
    $region42: #{tpu_custom_call.1} parent=1 // pred_check
      _
    $region43: #{tpu_custom_call.1} parent=1 // pred_check_branch
      %178 = sbr.rel (0) target = $region45
    $region44: #{tpu_custom_call.1} parent=1 // pred_region
      %s180 = ssub.s32 16, 16
      %181 = vsyncadd [#allocation6], %s180
      %184 = dma.smem_to_hbm [#allocation12], 16, %s4, [#allocation6]
    $region45: #{tpu_custom_call.1} parent=1 // pred_fallthru
      _
    // Predicated region
    $region46: #{tpu_custom_call.1} parent=1 // pred_check
      _
    $region47: #{tpu_custom_call.1} parent=1 // pred_check_branch
      %186 = sbr.rel (0) target = $region49
    $region48: #{tpu_custom_call.1} parent=1 // pred_region
      %187 = dma.done [#allocation6], 16
    $region49: #{tpu_custom_call.1} parent=1 // pred_fallthru
      _
    %188 = sfence
    %189 = vsyncpa [#allocation5], 1
    %190 = vsyncpa [#allocation8], 1
    %191 = vsyncpa [#allocation11], 1
    %192 = vsyncpa [#allocation6], 1

</llo_original>
